<compile_context>
chip_gen: v7x
topology: tpu7x:2x2x1
jax: 0.10.0
libtpu: 0.0.40
codegen_flags: <defaults>
</compile_context>

<pallas_src>
import jax
import jax.numpy as jnp
from jax.experimental import pallas as pl
from jax.experimental.pallas import tpu as pltpu


def _cls_seg_kernel(w_ref, b_ref, x_ref, o_ref):
    # w_ref: (K, C) classifier weight (resident, constant index_map)
    # b_ref: (K, 1) bias column (resident, constant index_map)
    # x_ref: (C, T) pixel tile in channel-major layout
    # o_ref: (K, T) logits tile
    acc = jnp.dot(w_ref[...], x_ref[...], preferred_element_type=jnp.float32)
    o_ref[...] = (acc + b_ref[...]).astype(o_ref.dtype)


def cls_seg_pallas(feat_nchw, weight, bias, *, tile_hw=2048):
    """feat_nchw: (N, C, H, W) float32
       weight   : (num_classes, C)   -- PyTorch Conv2d 1x1 weight squeezed
       bias     : (num_classes,)
       returns  : (N, num_classes, H, W)
    """
    N, C, H, W = feat_nchw.shape
    K = weight.shape[0]
    HW = H * W

    # Free reshapes only — no transpose, no pad, no extra HBM copies.
    x = feat_nchw.reshape(N, C, HW)
    b = bias.reshape(K, 1)

    # Pick a lane-dense pixel tile.  Large tiles amortize the ~0.35us per-step
    # overhead; per-block VMEM is only C*T*4 bytes (e.g. 256 KiB at C=32,
    # T=2048) so this is far under the scoped VMEM limit on v5e/v6e/v7x even
    # when double-buffered.
    if HW <= tile_hw:
        t = HW                       # full extent -> always a legal block dim
    else:
        t = max(128, (tile_hw // 128) * 128)  # multiple of 128 -> full vst;
                                              # Pallas masks the partial tail.
    grid = (N, pl.cdiv(HW, t))

    cost = pl.CostEstimate(
        flops=2 * N * HW * C * K,
        transcendentals=0,
        bytes_accessed=(N * C * HW + N * K * HW + K * C + K) * 4,
    )

    out = pl.pallas_call(
        _cls_seg_kernel,
        out_shape=jax.ShapeDtypeStruct((N, K, HW), feat_nchw.dtype),
        grid=grid,
        in_specs=[
            pl.BlockSpec((K, C), lambda n, j: (0, 0)),        # full weight, resident
            pl.BlockSpec((K, 1), lambda n, j: (0, 0)),        # bias column, resident
            pl.BlockSpec((None, C, t), lambda n, j: (n, 0, j)),  # pixel tile
        ],
        out_specs=pl.BlockSpec((None, K, t), lambda n, j: (n, 0, j)),
        compiler_params=pltpu.CompilerParams(
            dimension_semantics=("parallel", "parallel")),   # megacore shard on v7x
        cost_estimate=cost,
    )(weight, b, x)

    # (N, K, H*W) -> (N, K, H, W): free reshape, matches PyTorch NCHW output.
    return out.reshape(N, K, H, W)


class BaseDecodeHeadPallas:
    """Mirrors BaseDecodeHead.__init__ parameter shapes; cls_seg is the kernel."""

    def __init__(self, in_channels, channels, *, num_classes, dropout_ratio=0.1,
                 key=jax.random.PRNGKey(0)):
        self.in_channels = in_channels
        self.channels = channels
        self.num_classes = num_classes
        self.dropout_ratio = dropout_ratio
        kw, kb = jax.random.split(key)
        # conv_seg = nn.Conv2d(channels, num_classes, kernel_size=1)
        # init_weights(): normal(mean=0, std=0.01)
        self.conv_seg_weight = 0.01 * jax.random.normal(
            kw, (num_classes, channels), dtype=jnp.float32)
        self.conv_seg_bias = 0.01 * jax.random.normal(
            kb, (num_classes,), dtype=jnp.float32)

    def cls_seg(self, feat_nchw, *, tile_hw=2048):
        # TODO(synk): Dropout2d is active only in training mode; inference-mode
        # semantics (identity) are used here.
        return cls_seg_pallas(feat_nchw, self.conv_seg_weight,
                              self.conv_seg_bias, tile_hw=tile_hw)


if __name__ == "__main__":
    key = jax.random.PRNGKey(0)
    k_feat, k_params = jax.random.split(key)

    N, C, H, W = 2, 32, 16, 16
    num_classes = 8

    head = BaseDecodeHeadPallas(in_channels=C, channels=C,
                                num_classes=num_classes, key=k_params)
    feat = jax.random.normal(k_feat, (N, C, H, W), dtype=jnp.float32)

    # Reference: plain-JAX 1x1 conv (einsum) semantics.
    ref = jnp.einsum("nchw,kc->nkhw", feat, head.conv_seg_weight) \
        + head.conv_seg_bias.reshape(1, num_classes, 1, 1)

    # Single-tile path (H*W <= tile_hw).
    out = jax.block_until_ready(head.cls_seg(feat))
    assert out.shape == (N, num_classes, H, W)
    assert jnp.allclose(out, ref, atol=1e-4, rtol=1e-4)

    # Multi-tile path (exercise the pixel-axis grid).
    out2 = jax.block_until_ready(head.cls_seg(feat, tile_hw=128))
    assert jnp.allclose(out2, ref, atol=1e-4, rtol=1e-4)

    print("KERNEL_OK")
</pallas_src>

<mosaic_0001>
module attributes {stable_mosaic.version = 11 : i64} {
  func.func @_cls_seg_kernel(%arg0: i32, %arg1: i32, %arg2: memref<8x32xf32, #tpu.memory_space<vmem>>, %arg3: memref<8x1xf32, #tpu.memory_space<vmem>>, %arg4: memref<1x32x256xf32, #tpu.memory_space<vmem>>, %arg5: memref<1x8x256xf32, #tpu.memory_space<vmem>>) attributes {dimension_semantics = [#tpu.dimension_semantics<parallel>, #tpu.dimension_semantics<parallel>], iteration_bounds = array<i64: 2, 1>, scalar_prefetch = 0 : i64, scratch_operands = 0 : i64, tpu.core_type = #tpu.core_type<tc>, window_params = [{pipeline_mode = #tpu.pipeline_mode<synchronous>, transform_indices = @transform_0, window_bounds = array<i64: 8, 32>}, {pipeline_mode = #tpu.pipeline_mode<synchronous>, transform_indices = @transform_1, window_bounds = array<i64: 8, 1>}, {transform_indices = @transform_2, window_bounds = array<i64: 1, 32, 256>}, {transform_indices = @transform_3, window_bounds = array<i64: 1, 8, 256>}]} {
    %c0 = arith.constant 0 : index
    %c0_0 = arith.constant 0 : index
    %0 = vector.load %arg2[%c0, %c0_0] : memref<8x32xf32, #tpu.memory_space<vmem>>, vector<8x32xf32>
    %c0_1 = arith.constant 0 : index
    %c0_2 = arith.constant 0 : index
    %c0_3 = arith.constant 0 : index
    %1 = vector.load %arg4[%c0_1, %c0_2, %c0_3] : memref<1x32x256xf32, #tpu.memory_space<vmem>>, vector<1x32x256xf32>
    %2 = vector.shape_cast %1 : vector<1x32x256xf32> to vector<32x256xf32>
    %cst = arith.constant dense<0.000000e+00> : vector<8x256xf32>
    %3 = tpu.matmul %0, %2, %cst {dimension_numbers = #tpu.dot_dimension_numbers<[1], [0], [0], [1], [0, 0, 1, 1], [], []>} : vector<8x32xf32>, vector<32x256xf32>, vector<8x256xf32> -> vector<8x256xf32>
    %c0_4 = arith.constant 0 : index
    %c0_5 = arith.constant 0 : index
    %4 = vector.load %arg3[%c0_4, %c0_5] : memref<8x1xf32, #tpu.memory_space<vmem>>, vector<8x1xf32>
    %5 = vector.broadcast %4 : vector<8x1xf32> to vector<8x256xf32>
    %6 = arith.addf %3, %5 : vector<8x256xf32>
    %c0_6 = arith.constant 0 : index
    %c0_7 = arith.constant 0 : index
    %c0_8 = arith.constant 0 : index
    %7 = vector.load %arg5[%c0_6, %c0_7, %c0_8] : memref<1x8x256xf32, #tpu.memory_space<vmem>>, vector<1x8x256xf32>
    %8 = vector.shape_cast %7 : vector<1x8x256xf32> to vector<8x256xf32>
    %9 = vector.shape_cast %6 : vector<8x256xf32> to vector<1x8x256xf32>
    tpu.vector_store %arg5[%c0_6, %c0_7, %c0_8], %9 {strides = array<i32>} : memref<1x8x256xf32, #tpu.memory_space<vmem>>, vector<1x8x256xf32>,
    return
  }
  func.func @transform_0(%arg0: i32, %arg1: i32) -> (i32, i32) {
    %c0_i32 = arith.constant 0 : i32
    %c0_i32_0 = arith.constant 0 : i32
    %c0_i32_1 = arith.constant 0 : i32
    return %c0_i32, %c0_i32_0 : i32, i32
  }
  func.func @transform_1(%arg0: i32, %arg1: i32) -> (i32, i32) {
    %c0_i32 = arith.constant 0 : i32
    %c0_i32_0 = arith.constant 0 : i32
    %c0_i32_1 = arith.constant 0 : i32
    return %c0_i32, %c0_i32_0 : i32, i32
  }
  func.func @transform_2(%arg0: i32, %arg1: i32) -> (i32, i32, i32) {
    %c0_i32 = arith.constant 0 : i32
    %c0_i32_0 = arith.constant 0 : i32
    return %arg0, %c0_i32, %arg1 : i32, i32, i32
  }
  func.func @transform_3(%arg0: i32, %arg1: i32) -> (i32, i32, i32) {
    %c0_i32 = arith.constant 0 : i32
    %c0_i32_0 = arith.constant 0 : i32
    return %arg0, %c0_i32, %arg1 : i32, i32, i32
  }
}

</mosaic_0001>

<llo_original>
// kernel: tpu_custom_call.1
$region0: #{tpu_custom_call.1}
  #allocation0 [shape = 'u32[]', space=smem, size = 0x4, offset = 0x4, fixed_abs, tag = 'smem constant byte address 0x4 - core index']
  #allocation1 [shape = 'u32[144,128]{1,0:T(1,128)}', space=vmem, size = 0x12000, scoped, tag = 'internal scratch']
  %s0 = inlined_call_operand.vmem [shape: f32[8,32], index: 0, kind: input, shape index: {}]
  %s1 = inlined_call_operand.vmem [shape: f32[8,1], index: 1, kind: input, shape index: {}]
  %s2 = inlined_call_operand.hbm [shape: f32[2,32,256], index: 2, kind: input, shape index: {}]
  %s3 = inlined_call_operand.hbm [shape: f32[2,8,256], index: 3, kind: output, shape index: {}]
  %s4 = sld [smem:[#allocation0]]
  $region49: #{tpu_custom_call.1} parent=0
    _
  %s6 = ssub.s32 1, %s4
  %s7 = scalar_select 0, %s6, %s4
  $region1: #{tpu_custom_call.1} parent=0
    #allocation2 [shape = 'u8[65536]{0}', space=vmem, size = 0x10000, scoped, tag = 'input window, operand 2']
    #allocation3 [shape = 's32[2]{0}', space=sflag, size = 0x8, scoped, tag = 'scoped memory for tpu_custom_call.1']
    #allocation4 [shape = 's32[2]{0}', space=sflag, size = 0x8, scoped, tag = 'scoped memory for tpu_custom_call.1']
    #allocation5 [shape = 'u8[16384]{0}', space=vmem, size = 0x4000, scoped, tag = 'output window, operand 0']
    %8 = vsyncpa [#allocation3], 0
    %s9 = scalar_lea.sflag [#allocation3], 1
    %10 = vsyncpa %s9, 0
    %11 = vsyncpa [#allocation4], 0
    %s12 = scalar_lea.sflag [#allocation4], 1
    %13 = vsyncpa %s12, 0
    loop: start=0, step=1, limit=4
    $region2: #{tpu_custom_call.1} parent=1 // loop_pre_header
      _
    $region3: #{tpu_custom_call.1} parent=1 // loop_header
      %s15 = sphi 0, %s19
      %p16 = scmp.ge.s32.totalorder %s15, 4
      %s22 = sphi 0, %s34
      %s23 = sphi 0, %s30
      %s24 = sphi 0, %s22
      %s25 = sphi 0, %s23
      %s26 = sphi 0, %s24
      %s27 = sphi 0, %s25
      %s35 = sphi 0, %s35
      %s37 = sphi 0, %s35
      %s38 = sphi 0, %s37
      %s52 = sphi 0, %s38
      %s56 = sphi 0, %s56
      %s58 = sphi 0, %s56
      %s59 = sphi 0, %s58
      %s73 = sphi 0, %s59
      %s81 = sphi 0, %s83
      %s84 = sphi 0, %s81
      %s85 = sphi 0, %s84
      %s101 = sphi 0, %s85
      %s109 = sphi 0, %s111
      %s112 = sphi 0, %s109
      %s113 = sphi 0, %s112
      %s129 = sphi 0, %s113
    $region4: #{tpu_custom_call.1} parent=1 // loop_header_branch
      %18 = sbr.rel (%p16) target = $region8
    $region5: #{tpu_custom_call.1} parent=1 // loop_body
      %s20 = ssub.s32 %s15, 1
      %s21 = ssub.s32 %s15, 2
      %s28 = sadd.s32 1, %s23
      %p29 = scmp.ge.s32.totalorder %s28, 1
      %s30 = scalar_select %p29, 0, %s28
      %s31 = sadd.s32 1, %s22
      %s32 = scalar_select %p29, %s31, %s22
      %p33 = scmp.ge.s32.totalorder %s32, 2
      %s34 = scalar_select %p33, 0, %s32
      %s36 = sadd.s32 %s35, 1
      %p39 = scmp.eq.s32.totalorder %s15, 1
      %p40 = scmp.ne.s32.totalorder %s35, %s37
      %p41 = scmp.eq.s32.totalorder %s15, 0
      %p42 = por %p40, %p41
      %p43 = scmp.ne.s32.totalorder %s35, %s37
      %p44 = scmp.eq.s32.totalorder %s20, 1
      %p45 = por %p43, %p44
      %p46 = scmp.ne.s32.totalorder %s37, %s38
      %p47 = scmp.eq.s32.totalorder %s20, 0
      %p48 = por %p46, %p47
      %p49 = scmp.ne.s32.totalorder %s37, %s38
      %p50 = scmp.eq.s32.totalorder %s21, 1
      %p51 = por %p49, %p50
      %p53 = scmp.ne.s32.totalorder %s38, %s52
      %p54 = scmp.eq.s32.totalorder %s21, 0
      %p55 = por %p53, %p54
      %s57 = sadd.s32 %s56, 1
      %p60 = scmp.eq.s32.totalorder %s15, 1
      %p61 = scmp.ne.s32.totalorder %s56, %s58
      %p62 = scmp.eq.s32.totalorder %s15, 0
      %p63 = por %p61, %p62
      %p64 = scmp.ne.s32.totalorder %s56, %s58
      %p65 = scmp.eq.s32.totalorder %s20, 1
      %p66 = por %p64, %p65
      %p67 = scmp.ne.s32.totalorder %s58, %s59
      %p68 = scmp.eq.s32.totalorder %s20, 0
      %p69 = por %p67, %p68
      %p70 = scmp.ne.s32.totalorder %s58, %s59
      %p71 = scmp.eq.s32.totalorder %s21, 1
      %p72 = por %p70, %p71
      %p74 = scmp.ne.s32.totalorder %s59, %s73
      %p75 = scmp.eq.s32.totalorder %s21, 0
      %p76 = por %p74, %p75
      %s77 = ssub.s32 %s22, %s34
      %s78 = ssub.s32 %s23, %s30
      %s79 = sor.u32 %s77, %s78
      %p80 = scmp.eq.s32.totalorder %s79, 0
      %s82 = sadd.s32 %s81, 1
      %s83 = scalar_select %p80, %s81, %s82
      %p86 = pneg %p80
      %p87 = scmp.eq.s32.totalorder %s15, 1
      %p88 = por %p86, %p87
      %p89 = scmp.ne.s32.totalorder %s81, %s84
      %p90 = scmp.eq.s32.totalorder %s15, 0
      %p91 = por %p89, %p90
      %p92 = scmp.ne.s32.totalorder %s81, %s84
      %p93 = scmp.eq.s32.totalorder %s20, 1
      %p94 = por %p92, %p93
      %p95 = scmp.ne.s32.totalorder %s84, %s85
      %p96 = scmp.eq.s32.totalorder %s20, 0
      %p97 = por %p95, %p96
      %p98 = scmp.ne.s32.totalorder %s84, %s85
      %p99 = scmp.eq.s32.totalorder %s21, 1
      %p100 = por %p98, %p99
      %p102 = scmp.ne.s32.totalorder %s85, %s101
      %p103 = scmp.eq.s32.totalorder %s21, 0
      %p104 = por %p102, %p103
      %s105 = ssub.s32 %s22, %s34
      %s106 = ssub.s32 %s23, %s30
      %s107 = sor.u32 %s105, %s106
      %p108 = scmp.eq.s32.totalorder %s107, 0
      %s110 = sadd.s32 %s109, 1
      %s111 = scalar_select %p108, %s109, %s110
      %p114 = pneg %p108
      %p115 = scmp.eq.s32.totalorder %s15, 1
      %p116 = por %p114, %p115
      %p117 = scmp.ne.s32.totalorder %s109, %s112
      %p118 = scmp.eq.s32.totalorder %s15, 0
      %p119 = por %p117, %p118
      %p120 = scmp.ne.s32.totalorder %s109, %s112
      %p121 = scmp.eq.s32.totalorder %s20, 1
      %p122 = por %p120, %p121
      %p123 = scmp.ne.s32.totalorder %s112, %s113
      %p124 = scmp.eq.s32.totalorder %s20, 0
      %p125 = por %p123, %p124
      %p126 = scmp.ne.s32.totalorder %s112, %s113
      %p127 = scmp.eq.s32.totalorder %s21, 1
      %p128 = por %p126, %p127
      %p130 = scmp.ne.s32.totalorder %s113, %s129
      %p131 = scmp.eq.s32.totalorder %s21, 0
      %p132 = por %p130, %p131
      %p133 = scmp.le.s32.totalorder 1, %s15
      %p134 = scmp.lt.s32.totalorder %s15, 3
      %p135 = pnand %p133, %p134
      %p136 = pneg %p135
      // Predicated region
      $region9: #{tpu_custom_call.1} parent=5 // pred_check
        _
      $region10: #{tpu_custom_call.1} parent=5 // pred_check_branch
        %138 = sbr.rel (%p135) target = $region12
      $region11: #{tpu_custom_call.1} parent=5 // pred_region
        %s139 = ssub.s32 %s15, 1
        // Predicated region
        $region13: #{tpu_custom_call.1} parent=11 // pred_check
          %p140 = pneg %p48
        $region14: #{tpu_custom_call.1} parent=11 // pred_check_branch
          %142 = sbr.rel (%p140) target = $region16
        $region15: #{tpu_custom_call.1} parent=11 // pred_region
          _
        $region16: #{tpu_custom_call.1} parent=11 // pred_fallthru
          _
        // Predicated region
        $region17: #{tpu_custom_call.1} parent=11 // pred_check
          %p143 = pneg %p69
        $region18: #{tpu_custom_call.1} parent=11 // pred_check_branch
          %145 = sbr.rel (%p143) target = $region20
        $region19: #{tpu_custom_call.1} parent=11 // pred_region
          _
        $region20: #{tpu_custom_call.1} parent=11 // pred_fallthru
          _
      $region12: #{tpu_custom_call.1} parent=5 // pred_fallthru
        _
      %p146 = scmp.lt.s32.totalorder %s15, 2
      // Predicated region
      $region21: #{tpu_custom_call.1} parent=5 // pred_check
        %p147 = pneg %p146
      $region22: #{tpu_custom_call.1} parent=5 // pred_check_branch
        %149 = sbr.rel (%p147) target = $region24
      $region23: #{tpu_custom_call.1} parent=5 // pred_region
        // Predicated region
        $region25: #{tpu_custom_call.1} parent=23 // pred_check
          %p150 = pneg %p91
        $region26: #{tpu_custom_call.1} parent=23 // pred_check_branch
          %152 = sbr.rel (%p150) target = $region28
        $region27: #{tpu_custom_call.1} parent=23 // pred_region
          %s153 = sand.u32 %s81, 1
          %s154 = scalar_lea.sflag [#allocation3], %s153
          %s155 = sand.u32 %s81, 1
          %s156 = smul.addr %s155, 64
          %s157 = scalar_lea.vmem [#allocation2], %s156
          %s158 = smul.u32 2, %s23
          %s160 = ssub.s32 1024, 1024
          %161 = vsyncadd %s154, %s160
          %s162 = smul.addr %s22, 8
          %s163 = sadd.s32 %s158, %s162
          %s164 = smul.addr %s163, 128
          %s165 = scalar_lea.hbm %s2, %s164
          %s166 = sshll.u32 %s157, 4
          %s167 = int_to_ptr.vmem [resolvable:$true] %s166
          %172 = dma.hbm_to_vmem [thread:$0]  %s165, 1024, %s167, %s154, 256, 256, 16
        $region28: #{tpu_custom_call.1} parent=23 // pred_fallthru
          _
      $region24: #{tpu_custom_call.1} parent=5 // pred_fallthru
        _
      %p173 = scmp.le.s32.totalorder 1, %s15
      %p174 = scmp.lt.s32.totalorder %s15, 3
      %p175 = pnand %p173, %p174
      %p176 = pneg %p175
      // Predicated region
      $region29: #{tpu_custom_call.1} parent=5 // pred_check
        _
      $region30: #{tpu_custom_call.1} parent=5 // pred_check_branch
        %178 = sbr.rel (%p175) target = $region32
      $region31: #{tpu_custom_call.1} parent=5 // pred_region
        %s179 = ssub.s32 %s15, 1
        %s180 = sand.u32 %s84, 1
        %s181 = scalar_lea.sflag [#allocation3], %s180
        %s182 = sand.u32 %s84, 1
        %s183 = smul.addr %s182, 64
        %s184 = scalar_lea.vmem [#allocation2], %s183
        // Predicated region
        $region33: #{tpu_custom_call.1} parent=31 // pred_check
          %p185 = pneg %p97
        $region34: #{tpu_custom_call.1} parent=31 // pred_check_branch
          %187 = sbr.rel (%p185) target = $region36
        $region35: #{tpu_custom_call.1} parent=31 // pred_region
          %188 = dma.done %s181, 1024
        $region36: #{tpu_custom_call.1} parent=31 // pred_fallthru
          _
        %p189 = pneg %p48
        %p190 = pneg %p45
        %p191 = pneg %p69
        %p192 = pneg %p66
        %s193 = sand.u32 %s84, 1
        %s194 = scalar_lea.sflag [#allocation3], %s193
        %s195 = sand.u32 %s84, 1
        %s196 = smul.addr %s195, 64
        %s197 = scalar_lea.vmem [#allocation2], %s196
        %p198 = pneg %p97
        %p199 = pneg %p94
        %p200 = pneg %p125
        %p201 = pneg %p122
        %s202 = sand.u32 %s112, 1
        %s203 = scalar_lea.sflag [#allocation4], %s202
        %s204 = sand.u32 %s112, 1
        %s205 = smul.addr %s204, 16
        %s206 = scalar_lea.vmem [#allocation5], %s205
        %s207 = smul.u32 2, %s25
        %s208 = smul.u32 2, %s25
        %v209 = vld [vmem:[%s0] sm:$0xff]
        %v210 = vld [vmem:[%s184] sm:$0xff]
        %v211 = vld [vmem:[%s184 + $0x8] sm:$0xff]
        %v212 = vld [vmem:[%s184 + $0x10] sm:$0xff]
        %v213 = vld [vmem:[%s184 + $0x18] sm:$0xff]
        %v214 = vld [vmem:[%s184 + $0x20] sm:$0xff]
        %v215 = vld [vmem:[%s184 + $0x28] sm:$0xff]
        %v216 = vld [vmem:[%s184 + $0x30] sm:$0xff]
        %v217 = vld [vmem:[%s184 + $0x38] sm:$0xff]
        %v218 = vld [vmem:[%s1] sm:$0xff]
        %220 = vset.pattern.permute.xlu0 0
        %221 = vperm.xlu0 %220, %v218
        %v222 = vpop.permute.xlu0 %221
        %vm224 = vcmask 261120
        %v226 = vsel %vm224, %v209, 0
        %228 = vmatprep.subr.mxu0 %v211
        %229 = vmatpush1.msra.mxu0 %v210
        %230 = vmatprep.subr.mxu0 %v213
        %231 = vmatpush1.msra.mxu0 %v212
        %232 = vmatprep.subr.mxu0 %v215
        %233 = vmatpush1.msra.mxu0 %v214
        %234 = vmatprep.subr.mxu0 %v217
        %235 = vmatpush1.msra.mxu0 %v216
        %236 = vmatprep.subr.mxu0 0.0
        %237 = vmatpush1.msra.mxu0 0.0
        %238 = vmatprep.subr.mxu0 0.0
        %239 = vmatpush1.msra.mxu0 0.0
        %240 = vmatprep.subr.mxu0 0.0
        %241 = vmatpush1.msra.mxu0 0.0
        %242 = vmatprep.subr.mxu0 0.0
        %243 = vmatpush1.msra.mxu0 0.0
        %244 = vmatprep.subr.mxu0 0.0
        %245 = vmatpush1.msra.mxu0 0.0
        %246 = vmatprep.subr.mxu0 0.0
        %247 = vmatpush1.msra.mxu0 0.0
        %248 = vmatprep.subr.mxu0 0.0
        %249 = vmatpush1.msra.mxu0 0.0
        %250 = vmatprep.subr.mxu0 0.0
        %251 = vmatpush1.msra.mxu0 0.0
        %252 = vmatprep.subr.mxu0 0.0
        %253 = vmatpush1.msra.mxu0 0.0
        %254 = vmatprep.subr.mxu0 0.0
        %255 = vmatpush1.msra.mxu0 0.0
        %256 = vmatprep.subr.mxu0 0.0
        %257 = vmatpush1.msra.mxu0 0.0
        %258 = vmatprep.subr.mxu0 0.0
        %259 = vmatpush1.msra.mxu0 0.0
        %260 = vmatprep.subr.mxu0 0.0
        %261 = vmatpush1.msra.mxu0 0.0
        %262 = vmatprep.subr.mxu0 0.0
        %263 = vmatpush1.msra.mxu0 0.0
        %264 = vmatprep.subr.mxu0 0.0
        %265 = vmatpush1.msra.mxu0 0.0
        %266 = vmatprep.subr.mxu0 0.0
        %267 = vmatpush1.msra.mxu0 0.0
        %268 = vmatprep.subr.mxu0 0.0
        %269 = vmatpush1.msra.mxu0 0.0
        %270 = vmatprep.subr.mxu0 0.0
        %271 = vmatpush1.msra.mxu0 0.0
        %272 = vmatprep.subr.mxu0 0.0
        %273 = vmatpush1.msra.mxu0 0.0
        %274 = vmatprep.subr.mxu0 0.0
        %275 = vmatpush1.msra.mxu0 0.0
        %276 = vmatprep.subr.mxu0 0.0
        %277 = vmatpush1.msra.mxu0 0.0
        %278 = vmatprep.subr.mxu0 0.0
        %279 = vmatpush1.msra.mxu0 0.0
        %280 = vmatprep.subr.mxu0 0.0
        %281 = vmatpush1.msra.mxu0 0.0
        %282 = vmatprep.subr.mxu0 0.0
        %283 = vmatpush1.msra.mxu0 0.0
        %284 = vmatprep.subr.mxu0 0.0
        %285 = vmatpush1.msra.mxu0 0.0
        %286 = vmatprep.subr.mxu0 0.0
        %287 = vmatpush1.msra.mxu0 0.0
        %288 = vmatprep.subr.mxu0 0.0
        %289 = vmatpush1.msra.mxu0 0.0
        %290 = vmatprep.subr.mxu0 0.0
        %291 = vmatpush1.msra.mxu0 0.0
        %292 = vmatprep.mubr.f32.mxu0 0.0
        %293 = vmatmul.mubr.f32.gmra.mrb[0].mxu0 %v226
        %v294 = vpop.f32.mrb[0].mxu0
        %v295 = vadd.f32 %v222, %v294
        %v296 = vpop.f32.mrb[0].mxu0
        %v297 = vadd.f32 %v222, %v296
        %298 = vdwg.mxu0
        %299 = vst [vmem:[%s206] sm:$0xff] %v295
        %300 = vst [vmem:[%s206 + $0x8] sm:$0xff] %v297
        %s301 = sand.u32 %s112, 1
        %s302 = scalar_lea.sflag [#allocation4], %s301
        %s303 = sand.u32 %s112, 1
        %s304 = smul.addr %s303, 16
        %s305 = scalar_lea.vmem [#allocation5], %s304
        // Predicated region
        $region37: #{tpu_custom_call.1} parent=31 // pred_check
          %p306 = pneg %p122
        $region38: #{tpu_custom_call.1} parent=31 // pred_check_branch
          %308 = sbr.rel (%p306) target = $region40
        $region39: #{tpu_custom_call.1} parent=31 // pred_region
          %s309 = smul.u32 2, %s25
          %s311 = ssub.s32 256, 256
          %312 = vsyncadd %s302, %s311
          %s313 = smul.addr %s24, 2
          %s314 = sadd.s32 %s309, %s313
          %s315 = smul.addr %s314, 128
          %s316 = scalar_lea.hbm %s3, %s315
          %s318 = sshll.u32 %s305, 4
          %s319 = int_to_ptr.vmem [resolvable:$true] %s318
          %321 = dma.vmem_to_hbm [thread:$0]  %s319, 256, %s316, %s302
        $region40: #{tpu_custom_call.1} parent=31 // pred_fallthru
          _
      $region32: #{tpu_custom_call.1} parent=5 // pred_fallthru
        _
      %p322 = scmp.le.s32.totalorder 2, %s15
      // Predicated region
      $region41: #{tpu_custom_call.1} parent=5 // pred_check
        %p323 = pneg %p322
      $region42: #{tpu_custom_call.1} parent=5 // pred_check_branch
        %325 = sbr.rel (%p323) target = $region44
      $region43: #{tpu_custom_call.1} parent=5 // pred_region
        %s326 = ssub.s32 %s15, 2
        // Predicated region
        $region45: #{tpu_custom_call.1} parent=43 // pred_check
          %p327 = pneg %p128
        $region46: #{tpu_custom_call.1} parent=43 // pred_check_branch
          %329 = sbr.rel (%p327) target = $region48
        $region47: #{tpu_custom_call.1} parent=43 // pred_region
          %s330 = sand.u32 %s113, 1
          %s331 = scalar_lea.sflag [#allocation4], %s330
          %s332 = sand.u32 %s113, 1
          %s333 = smul.addr %s332, 16
          %s334 = scalar_lea.vmem [#allocation5], %s333
          %335 = dma.done %s331, 256
        $region48: #{tpu_custom_call.1} parent=43 // pred_fallthru
          _
      $region44: #{tpu_custom_call.1} parent=5 // pred_fallthru
        _
    $region6: #{tpu_custom_call.1} parent=1 // loop_footer
      %s19 = sadd.s32 1, %s15
    $region7: #{tpu_custom_call.1} parent=1 // loop_footer_branch
      %14 = sbr.rel target = $region3
    $region8: #{tpu_custom_call.1} parent=1 // loop_exit
      _
    %336 = vsyncpa [#allocation3], 1
    %s337 = scalar_lea.sflag [#allocation3], 1
    %338 = vsyncpa %s337, 1
    %339 = vsyncpa [#allocation4], 1
    %s340 = scalar_lea.sflag [#allocation4], 1
    %341 = vsyncpa %s340, 1

</llo_original>
